<compile_context>
chip_gen: v5e
topology: v5e:2x2
jax: 0.10.0
libtpu: 0.0.40
codegen_flags: <defaults>
</compile_context>

<pallas_src>
import functools

import jax
import jax.numpy as jnp
from jax.experimental import pallas as pl
from jax.experimental.pallas import tpu as pltpu

_LANE = 128      # last-dim vreg lanes
_SUBLANE = 8     # second-to-last-dim vreg sublanes (f32)


def _round_up(x, m):
    return (x + m - 1) // m * m


def _fused_multilayer_kernel(*refs, n_real, num_layers, final_act,
                             has_bn, has_l2norm, eps, mxu_dtype):
    """One grid step == one GeneralLayer applied to the resident activation.

    refs layout (in order): x, w, b, [gamma, beta,] out, act_scratch
      x            : [N_pad, D_pad]          (read only at layer 0)
      w            : [D_pad, D_pad]          (this layer's weight, squeezed)
      b/gamma/beta : [1, D_pad]              (this layer's vectors, squeezed)
      out          : [N_pad, D_pad]
      act_scratch  : VMEM [N_pad, D_pad] f32 (activation carried across layers)
    """
    if has_bn:
        x_ref, w_ref, b_ref, gamma_ref, beta_ref, o_ref, act_ref = refs
    else:
        x_ref, w_ref, b_ref, o_ref, act_ref = refs
        gamma_ref = beta_ref = None

    layer = pl.program_id(0)

    # Load the padded input into the resident activation buffer once.
    @pl.when(layer == 0)
    def _():
        act_ref[...] = x_ref[...].astype(jnp.float32)

    x = act_ref[...]                                   # [N_pad, D_pad] f32
    w = w_ref[...]                                     # [D_pad, D_pad]
    b = b_ref[...].astype(jnp.float32)                 # [1, D_pad]

    # Linear (MXU). mxu_dtype=f32 keeps PyTorch numerics; bf16 is an option
    # for wide layers on v6e/v7x (accumulation stays f32 either way).
    y = jnp.dot(x.astype(mxu_dtype), w.astype(mxu_dtype),
                preferred_element_type=jnp.float32) + b

    n_pad, d_pad = y.shape

    # BatchNorm1d, training-mode forward, biased batch variance.
    # Single pass: var = E[y^2] - mean^2, folded into one scale/shift FMA.
    if has_bn:
        if n_pad != n_real:
            # Exclude zero-padded rows from the batch statistics.
            row_ids = jax.lax.broadcasted_iota(jnp.int32, (n_pad, d_pad), 0)
            ym = jnp.where(row_ids < n_real, y, 0.0)
        else:
            ym = y
        inv_n = 1.0 / float(n_real)
        mean = jnp.sum(ym, axis=0, keepdims=True) * inv_n           # [1, D_pad]
        ex2 = jnp.sum(ym * ym, axis=0, keepdims=True) * inv_n       # [1, D_pad]
        var = jnp.maximum(ex2 - mean * mean, 0.0)
        gamma = gamma_ref[...].astype(jnp.float32)
        beta = beta_ref[...].astype(jnp.float32)
        scale = gamma * jax.lax.rsqrt(var + eps)                    # [1, D_pad]
        shift = beta - mean * scale
        y = y * scale + shift

    # ReLU (last layer gated by final_act; GraphGym default act is relu).
    if final_act:
        y = jnp.maximum(y, 0.0)
    else:
        not_last = layer < num_layers - 1
        y = jnp.where(not_last, jnp.maximum(y, 0.0), y)

    # F.normalize(p=2, dim=1): x / max(||x||, 1e-12)  ==  x * rsqrt(max(sumsq, 1e-24))
    # (padded columns are exactly zero, so they don't perturb the row norm).
    if has_l2norm:
        sumsq = jnp.sum(y * y, axis=1, keepdims=True)               # [N_pad, 1]
        y = y * jax.lax.rsqrt(jnp.maximum(sumsq, 1e-24))

    act_ref[...] = y
    o_ref[...] = y.astype(o_ref.dtype)


def general_multilayer_forward(x, params, *, final_act=True, has_bn=True,
                               has_l2norm=True, eps=1e-5,
                               mxu_dtype=jnp.float32, out_dtype=None):
    """GeneralMultiLayer.forward for name='Linear', as one fused pallas_call.

    x: [N, dim_in].  params[i] = dict(w=[d_in, d_out], b=[1, d_out],
                                      gamma=[1, d_out], beta=[1, d_out]).
    """
    n, d_in = x.shape
    num_layers = len(params)
    assert num_layers >= 1
    assert params[0]["w"].shape[0] == d_in
    out_dtype = x.dtype if out_dtype is None else out_dtype

    # Lane-dense padding: common feature width D_pad (multiple of 128) for every
    # layer, rows padded to the sublane granule. Padded weight columns / bias /
    # gamma / beta are zero, so padded feature columns stay exactly zero through
    # Linear, BN, ReLU and L2-norm (semantics unchanged).
    dims = [d_in] + [p["w"].shape[1] for p in params]
    d_pad = _round_up(max(dims), _LANE)
    n_pad = _round_up(max(n, _SUBLANE), _SUBLANE)

    x_p = jnp.zeros((n_pad, d_pad), jnp.float32).at[:n, :d_in].set(
        x.astype(jnp.float32))

    w_stack = jnp.zeros((num_layers, d_pad, d_pad), jnp.float32)
    b_stack = jnp.zeros((num_layers, 1, d_pad), jnp.float32)
    gamma_stack = jnp.zeros((num_layers, 1, d_pad), jnp.float32)
    beta_stack = jnp.zeros((num_layers, 1, d_pad), jnp.float32)
    for i, p in enumerate(params):
        di, do = p["w"].shape
        w_stack = w_stack.at[i, :di, :do].set(p["w"].astype(jnp.float32))
        b_stack = b_stack.at[i, 0, :do].set(p["b"].reshape(-1).astype(jnp.float32))
        gamma_stack = gamma_stack.at[i, 0, :do].set(
            p["gamma"].reshape(-1).astype(jnp.float32))
        beta_stack = beta_stack.at[i, 0, :do].set(
            p["beta"].reshape(-1).astype(jnp.float32))

    kernel = functools.partial(
        _fused_multilayer_kernel,
        n_real=n, num_layers=num_layers, final_act=final_act,
        has_bn=has_bn, has_l2norm=has_l2norm, eps=eps, mxu_dtype=mxu_dtype)

    act_spec = pl.BlockSpec((n_pad, d_pad), lambda l: (0, 0))
    # Per-layer slices: leading layer axis is squeezed (None) and indexed by the
    # grid step -> each layer's params are pipelined into VMEM layer by layer.
    per_layer_mat = pl.BlockSpec((None, d_pad, d_pad), lambda l: (l, 0, 0))
    per_layer_vec = pl.BlockSpec((None, 1, d_pad), lambda l: (l, 0, 0))

    inputs = [x_p, w_stack, b_stack]
    in_specs = [act_spec, per_layer_mat, per_layer_vec]
    if has_bn:
        inputs += [gamma_stack, beta_stack]
        in_specs += [per_layer_vec, per_layer_vec]

    out = pl.pallas_call(
        kernel,
        out_shape=jax.ShapeDtypeStruct((n_pad, d_pad), out_dtype),
        grid_spec=pltpu.PrefetchScalarGridSpec(
            num_scalar_prefetch=0,
            grid=(num_layers,),
            in_specs=in_specs,
            out_specs=act_spec,
            scratch_shapes=[pltpu.VMEM((n_pad, d_pad), jnp.float32)],
        ),
        compiler_params=pltpu.CompilerParams(
            # Layers are strictly sequential (activation carried in scratch).
            dimension_semantics=("arbitrary",),
        ),
    )(*inputs)

    d_out = params[-1]["w"].shape[1]
    return out[:n, :d_out]


def init_general_multilayer_params(key, num_layers, dim_in, dim_out,
                                   dim_inner=None, dtype=jnp.float32):
    """Parameter shapes matching GeneralMultiLayer.__init__ (Linear + BN1d)."""
    dim_inner = dim_in if dim_inner is None else dim_inner
    params = []
    for i in range(num_layers):
        d_in = dim_in if i == 0 else dim_inner
        d_out = dim_out if i == num_layers - 1 else dim_inner
        key, kw, kb = jax.random.split(key, 3)
        bound = 1.0 / (d_in ** 0.5)     # nn.Linear default init bound
        w = jax.random.uniform(kw, (d_in, d_out), dtype, -bound, bound)  # [D_in, D_out]
        b = jax.random.uniform(kb, (1, d_out), dtype, -bound, bound)
        gamma = jnp.ones((1, d_out), dtype)   # BatchNorm1d weight
        beta = jnp.zeros((1, d_out), dtype)   # BatchNorm1d bias
        params.append(dict(w=w, b=b, gamma=gamma, beta=beta))
    return params


def _reference_forward(x, params, *, final_act=True, has_bn=True,
                       has_l2norm=True, eps=1e-5):
    """Pure-JAX reference mirroring the PyTorch module (for correctness check)."""
    num_layers = len(params)
    h = x.astype(jnp.float32)
    for i, p in enumerate(params):
        h = h @ p["w"].astype(jnp.float32) + p["b"].astype(jnp.float32)
        if has_bn:
            mean = jnp.mean(h, axis=0, keepdims=True)
            var = jnp.mean((h - mean) ** 2, axis=0, keepdims=True)
            h = (h - mean) * jax.lax.rsqrt(var + eps)
            h = h * p["gamma"].astype(jnp.float32) + p["beta"].astype(jnp.float32)
        if (i < num_layers - 1) or final_act:
            h = jnp.maximum(h, 0.0)
        if has_l2norm:
            nrm = jnp.sqrt(jnp.sum(h * h, axis=1, keepdims=True))
            h = h / jnp.maximum(nrm, 1e-12)
    return h


if __name__ == "__main__":
    key = jax.random.PRNGKey(0)
    k_x, k_p = jax.random.split(key)

    # Small shapes consistent with the module: 16 nodes, dim_in=8,
    # dim_inner=32, dim_out=16, 2 stacked GeneralLayers.
    N, DIM_IN, DIM_INNER, DIM_OUT, NUM_LAYERS = 16, 8, 32, 16, 2

    x = jax.random.normal(k_x, (N, DIM_IN), jnp.float32)
    params = init_general_multilayer_params(
        k_p, NUM_LAYERS, DIM_IN, DIM_OUT, dim_inner=DIM_INNER)

    out = general_multilayer_forward(x, params, final_act=True)
    out = jax.block_until_ready(out)

    assert out.shape == (N, DIM_OUT), out.shape
    assert bool(jnp.all(jnp.isfinite(out)))

    # Rows are unit-norm (or zero) after F.normalize.
    row_norms = jnp.sqrt(jnp.sum(out * out, axis=1))
    assert bool(jnp.all(row_norms < 1.0 + 1e-4)), row_norms

    # Match the pure-JAX reference of the PyTorch forward.
    ref = _reference_forward(x, params, final_act=True)
    assert bool(jnp.allclose(out, ref, atol=1e-4, rtol=1e-4)), (
        float(jnp.max(jnp.abs(out - ref))))

    print("KERNEL_OK")
</pallas_src>

<mosaic_0001>
module attributes {stable_mosaic.version = 11 : i64} {
  func.func @_fused_multilayer_kernel(%arg0: i32, %arg1: memref<16x128xf32, #tpu.memory_space<vmem>>, %arg2: memref<1x128x128xf32, #tpu.memory_space<vmem>>, %arg3: memref<1x1x128xf32, #tpu.memory_space<vmem>>, %arg4: memref<1x1x128xf32, #tpu.memory_space<vmem>>, %arg5: memref<1x1x128xf32, #tpu.memory_space<vmem>>, %arg6: memref<16x128xf32, #tpu.memory_space<vmem>>, %arg7: memref<16x128xf32, #tpu.memory_space<vmem>>) attributes {dimension_semantics = [#tpu.dimension_semantics<arbitrary>], iteration_bounds = array<i64: 2>, scalar_prefetch = 0 : i64, scratch_operands = 1 : i64, tpu.core_type = #tpu.core_type<tc>, window_params = [{pipeline_mode = #tpu.pipeline_mode<synchronous>, transform_indices = @transform_0, window_bounds = array<i64: 16, 128>}, {transform_indices = @transform_1, window_bounds = array<i64: 1, 128, 128>}, {transform_indices = @transform_2, window_bounds = array<i64: 1, 1, 128>}, {transform_indices = @transform_3, window_bounds = array<i64: 1, 1, 128>}, {transform_indices = @transform_4, window_bounds = array<i64: 1, 1, 128>}, {pipeline_mode = #tpu.pipeline_mode<synchronous>, transform_indices = @transform_5, window_bounds = array<i64: 16, 128>}]} {
    %c0_i32 = arith.constant 0 : i32
    %0 = arith.cmpi eq, %arg0, %c0_i32 : i32
    %1 = arith.extui %0 : i1 to i32
    %c0_i32_0 = arith.constant 0 : i32
    %2 = arith.cmpi ne, %1, %c0_i32_0 : i32
    scf.if %2 {
      %c0_27 = arith.constant 0 : index
      %c0_28 = arith.constant 0 : index
      %50 = vector.load %arg1[%c0_27, %c0_28] : memref<16x128xf32, #tpu.memory_space<vmem>>, vector<16x128xf32>
      %c0_29 = arith.constant 0 : index
      %c0_30 = arith.constant 0 : index
      %51 = vector.load %arg7[%c0_29, %c0_30] : memref<16x128xf32, #tpu.memory_space<vmem>>, vector<16x128xf32>
      tpu.vector_store %arg7[%c0_29, %c0_30], %50 {strides = array<i32>} : memref<16x128xf32, #tpu.memory_space<vmem>>, vector<16x128xf32>,
    } else {
    }
    %c0 = arith.constant 0 : index
    %c0_1 = arith.constant 0 : index
    %3 = vector.load %arg7[%c0, %c0_1] : memref<16x128xf32, #tpu.memory_space<vmem>>, vector<16x128xf32>
    %c0_2 = arith.constant 0 : index
    %c0_3 = arith.constant 0 : index
    %c0_4 = arith.constant 0 : index
    %4 = vector.load %arg2[%c0_2, %c0_3, %c0_4] : memref<1x128x128xf32, #tpu.memory_space<vmem>>, vector<1x128x128xf32>
    %5 = vector.shape_cast %4 : vector<1x128x128xf32> to vector<128x128xf32>
    %c0_5 = arith.constant 0 : index
    %c0_6 = arith.constant 0 : index
    %c0_7 = arith.constant 0 : index
    %6 = vector.load %arg3[%c0_5, %c0_6, %c0_7] : memref<1x1x128xf32, #tpu.memory_space<vmem>>, vector<1x1x128xf32>
    %7 = vector.shape_cast %6 : vector<1x1x128xf32> to vector<1x128xf32>
    %cst = arith.constant dense<0.000000e+00> : vector<16x128xf32>
    %8 = tpu.matmul %3, %5, %cst {dimension_numbers = #tpu.dot_dimension_numbers<[1], [0], [0], [1], [0, 0, 1, 1], [], []>} : vector<16x128xf32>, vector<128x128xf32>, vector<16x128xf32> -> vector<16x128xf32>
    %9 = vector.broadcast %7 : vector<1x128xf32> to vector<16x128xf32>
    %10 = arith.addf %8, %9 : vector<16x128xf32>
    %cst_8 = arith.constant dense<0.000000e+00> : vector<128xf32>
    %11 = vector.multi_reduction <add>, %10, %cst_8 [0] : vector<16x128xf32> to vector<128xf32>
    %12 = vector.shape_cast %11 : vector<128xf32> to vector<1x128xf32>
    %cst_9 = arith.constant 6.250000e-02 : f32
    %13 = vector.broadcast %cst_9 : f32 to vector<1x128xf32>
    %14 = arith.mulf %12, %13 : vector<1x128xf32>
    %15 = arith.mulf %10, %10 : vector<16x128xf32>
    %cst_10 = arith.constant dense<0.000000e+00> : vector<128xf32>
    %16 = vector.multi_reduction <add>, %15, %cst_10 [0] : vector<16x128xf32> to vector<128xf32>
    %17 = vector.shape_cast %16 : vector<128xf32> to vector<1x128xf32>
    %cst_11 = arith.constant 6.250000e-02 : f32
    %18 = vector.broadcast %cst_11 : f32 to vector<1x128xf32>
    %19 = arith.mulf %17, %18 : vector<1x128xf32>
    %20 = arith.mulf %14, %14 : vector<1x128xf32>
    %21 = arith.subf %19, %20 : vector<1x128xf32>
    %cst_12 = arith.constant 0.000000e+00 : f32
    %22 = vector.broadcast %cst_12 : f32 to vector<1x128xf32>
    %23 = arith.maximumf %21, %22 : vector<1x128xf32>
    %c0_13 = arith.constant 0 : index
    %c0_14 = arith.constant 0 : index
    %c0_15 = arith.constant 0 : index
    %24 = vector.load %arg4[%c0_13, %c0_14, %c0_15] : memref<1x1x128xf32, #tpu.memory_space<vmem>>, vector<1x1x128xf32>
    %25 = vector.shape_cast %24 : vector<1x1x128xf32> to vector<1x128xf32>
    %c0_16 = arith.constant 0 : index
    %c0_17 = arith.constant 0 : index
    %c0_18 = arith.constant 0 : index
    %26 = vector.load %arg5[%c0_16, %c0_17, %c0_18] : memref<1x1x128xf32, #tpu.memory_space<vmem>>, vector<1x1x128xf32>
    %27 = vector.shape_cast %26 : vector<1x1x128xf32> to vector<1x128xf32>
    %cst_19 = arith.constant 9.99999974E-6 : f32
    %28 = vector.broadcast %cst_19 : f32 to vector<1x128xf32>
    %29 = arith.addf %23, %28 : vector<1x128xf32>
    %30 = math.rsqrt %29 : vector<1x128xf32>
    %31 = arith.mulf %25, %30 : vector<1x128xf32>
    %32 = arith.mulf %14, %31 : vector<1x128xf32>
    %33 = arith.subf %27, %32 : vector<1x128xf32>
    %34 = vector.broadcast %31 : vector<1x128xf32> to vector<16x128xf32>
    %35 = arith.mulf %10, %34 : vector<16x128xf32>
    %36 = vector.broadcast %33 : vector<1x128xf32> to vector<16x128xf32>
    %37 = arith.addf %35, %36 : vector<16x128xf32>
    %cst_20 = arith.constant 0.000000e+00 : f32
    %38 = vector.broadcast %cst_20 : f32 to vector<16x128xf32>
    %39 = arith.maximumf %37, %38 : vector<16x128xf32>
    %40 = arith.mulf %39, %39 : vector<16x128xf32>
    %cst_21 = arith.constant dense<0.000000e+00> : vector<16xf32>
    %41 = vector.multi_reduction <add>, %40, %cst_21 [1] : vector<16x128xf32> to vector<16xf32>
    %42 = vector.shape_cast %41 : vector<16xf32> to vector<16x1xf32>
    %cst_22 = arith.constant 1.000000e-24 : f32
    %43 = vector.broadcast %cst_22 : f32 to vector<16x1xf32>
    %44 = arith.maximumf %42, %43 : vector<16x1xf32>
    %45 = math.rsqrt %44 : vector<16x1xf32>
    %46 = vector.broadcast %45 : vector<16x1xf32> to vector<16x128xf32>
    %47 = arith.mulf %39, %46 : vector<16x128xf32>
    %c0_23 = arith.constant 0 : index
    %c0_24 = arith.constant 0 : index
    %48 = vector.load %arg7[%c0_23, %c0_24] : memref<16x128xf32, #tpu.memory_space<vmem>>, vector<16x128xf32>
    tpu.vector_store %arg7[%c0_23, %c0_24], %47 {strides = array<i32>} : memref<16x128xf32, #tpu.memory_space<vmem>>, vector<16x128xf32>,
    %c0_25 = arith.constant 0 : index
    %c0_26 = arith.constant 0 : index
    %49 = vector.load %arg6[%c0_25, %c0_26] : memref<16x128xf32, #tpu.memory_space<vmem>>, vector<16x128xf32>
    tpu.vector_store %arg6[%c0_25, %c0_26], %47 {strides = array<i32>} : memref<16x128xf32, #tpu.memory_space<vmem>>, vector<16x128xf32>,
    return
  }
  func.func @transform_0(%arg0: i32) -> (i32, i32) {
    %c0_i32 = arith.constant 0 : i32
    %c0_i32_0 = arith.constant 0 : i32
    %c0_i32_1 = arith.constant 0 : i32
    return %c0_i32, %c0_i32_0 : i32, i32
  }
  func.func @transform_1(%arg0: i32) -> (i32, i32, i32) {
    %c0_i32 = arith.constant 0 : i32
    %c0_i32_0 = arith.constant 0 : i32
    %c0_i32_1 = arith.constant 0 : i32
    return %arg0, %c0_i32, %c0_i32_0 : i32, i32, i32
  }
  func.func @transform_2(%arg0: i32) -> (i32, i32, i32) {
    %c0_i32 = arith.constant 0 : i32
    %c0_i32_0 = arith.constant 0 : i32
    %c0_i32_1 = arith.constant 0 : i32
    return %arg0, %c0_i32, %c0_i32_0 : i32, i32, i32
  }
  func.func @transform_3(%arg0: i32) -> (i32, i32, i32) {
    %c0_i32 = arith.constant 0 : i32
    %c0_i32_0 = arith.constant 0 : i32
    %c0_i32_1 = arith.constant 0 : i32
    return %arg0, %c0_i32, %c0_i32_0 : i32, i32, i32
  }
  func.func @transform_4(%arg0: i32) -> (i32, i32, i32) {
    %c0_i32 = arith.constant 0 : i32
    %c0_i32_0 = arith.constant 0 : i32
    %c0_i32_1 = arith.constant 0 : i32
    return %arg0, %c0_i32, %c0_i32_0 : i32, i32, i32
  }
  func.func @transform_5(%arg0: i32) -> (i32, i32) {
    %c0_i32 = arith.constant 0 : i32
    %c0_i32_0 = arith.constant 0 : i32
    %c0_i32_1 = arith.constant 0 : i32
    return %c0_i32, %c0_i32_0 : i32, i32
  }
}

</mosaic_0001>

<llo_original>
// kernel: tpu_custom_call.1
$region0: #{tpu_custom_call.1}
  #allocation0 [shape = 'u32[]', space=smem, size = 0x4, offset = 0x4, fixed_abs, tag = 'smem constant byte address 0x4 - core index']
  #allocation1 [shape = 'u32[72,128]{1,0:T(1,128)}', space=vmem, size = 0x9000, scoped, tag = 'internal scratch']
  #allocation2 [shape = 'f32[16,128]{1,0:T(8,128)}', space=vmem, size = 0x2000, scoped, tag = 'scratch operand']
  %s0 = inlined_call_operand.hbm [shape: f32[16,128], index: 0, kind: input, shape index: {}]
  %s1 = inlined_call_operand.hbm [shape: f32[2,128,128], index: 1, kind: input, shape index: {}]
  %s2 = inlined_call_operand.hbm [shape: f32[2,1,128], index: 2, kind: input, shape index: {}]
  %s3 = inlined_call_operand.vmem [shape: f32[2,1,128], index: 3, kind: input, shape index: {}]
  %s4 = inlined_call_operand.hbm [shape: f32[2,1,128], index: 4, kind: input, shape index: {}]
  %s5 = inlined_call_operand.hbm [shape: f32[16,128], index: 5, kind: output, shape index: {}]
  %s6 = sld [smem:[#allocation0]]
  $region73: #{tpu_custom_call.1} parent=0
    _
  %s8 = ssub.s32 1, %s6
  %s9 = scalar_select 0, %s8, %s6
  $region1: #{tpu_custom_call.1} parent=0
    #allocation3 [shape = 'u8[8192]{0}', space=vmem, size = 0x2000, scoped, tag = 'input window, operand 0, single buffered']
    #allocation4 [shape = 's32[2]{0}', space=sflag, size = 0x8, scoped, tag = 'scoped memory for tpu_custom_call.1']
    #allocation5 [shape = 's32[2]{0}', space=sflag, size = 0x8, scoped, tag = 'scoped memory for tpu_custom_call.1']
    #allocation6 [shape = 'u8[131072]{0}', space=vmem, size = 0x20000, scoped, tag = 'input window, operand 1']
    #allocation7 [shape = 's32[2]{0}', space=sflag, size = 0x8, scoped, tag = 'scoped memory for tpu_custom_call.1']
    #allocation8 [shape = 'u8[1024]{0}', space=vmem, size = 0x400, scoped, tag = 'input window, operand 2']
    #allocation9 [shape = 'u8[1024]{0}', space=vmem, size = 0x400, scoped, tag = 'input window, operand 4']
    #allocation10 [shape = 's32[2]{0}', space=sflag, size = 0x8, scoped, tag = 'scoped memory for tpu_custom_call.1']
    #allocation11 [shape = 'u8[8192]{0}', space=vmem, size = 0x2000, scoped, tag = 'output window, operand 0, single buffered']
    %10 = vsyncpa [#allocation4], 0
    %11 = vsyncpa [#allocation7], 0
    %s12 = scalar_lea.sflag [#allocation7], 1
    %13 = vsyncpa %s12, 0
    %14 = vsyncpa [#allocation10], 0
    %s15 = scalar_lea.sflag [#allocation10], 1
    %16 = vsyncpa %s15, 0
    %17 = vsyncpa [#allocation5], 0
    loop: start=0, step=1, limit=4
    $region2: #{tpu_custom_call.1} parent=1 // loop_pre_header
      _
    $region3: #{tpu_custom_call.1} parent=1 // loop_header
      %s19 = sphi 0, %s23
      %p20 = scmp.ge.s32.totalorder %s19, 4
      %s27 = sphi 0, %s27
      %s29 = sphi 0, %s27
      %s30 = sphi 0, %s29
      %s44 = sphi 0, %s30
      %s50 = sphi 0, %s52
      %s53 = sphi 0, %s50
      %s54 = sphi 0, %s53
      %s70 = sphi 0, %s54
      %s76 = sphi 0, %s78
      %s79 = sphi 0, %s76
      %s80 = sphi 0, %s79
      %s96 = sphi 0, %s80
      %s102 = sphi 0, %s104
      %s105 = sphi 0, %s102
      %s106 = sphi 0, %s105
      %s122 = sphi 0, %s106
      %s128 = sphi 0, %s130
      %s131 = sphi 0, %s128
      %s132 = sphi 0, %s131
      %s148 = sphi 0, %s132
      %s152 = sphi 0, %s152
      %s154 = sphi 0, %s152
      %s155 = sphi 0, %s154
      %s169 = sphi 0, %s155
    $region4: #{tpu_custom_call.1} parent=1 // loop_header_branch
      %22 = sbr.rel (%p20) target = $region8
    $region5: #{tpu_custom_call.1} parent=1 // loop_body
      %s24 = ssub.s32 %s19, 1
      %s25 = ssub.s32 %s19, 2
      %s26 = sadd.s32 %s19, 1
      %s28 = sadd.s32 %s27, 1
      %p31 = scmp.eq.s32.totalorder %s19, 1
      %p32 = scmp.ne.s32.totalorder %s27, %s29
      %p33 = scmp.eq.s32.totalorder %s19, 0
      %p34 = por %p32, %p33
      %p35 = scmp.ne.s32.totalorder %s27, %s29
      %p36 = scmp.eq.s32.totalorder %s24, 1
      %p37 = por %p35, %p36
      %p38 = scmp.ne.s32.totalorder %s29, %s30
      %p39 = scmp.eq.s32.totalorder %s24, 0
      %p40 = por %p38, %p39
      %p41 = scmp.ne.s32.totalorder %s29, %s30
      %p42 = scmp.eq.s32.totalorder %s25, 1
      %p43 = por %p41, %p42
      %p45 = scmp.ne.s32.totalorder %s30, %s44
      %p46 = scmp.eq.s32.totalorder %s25, 0
      %p47 = por %p45, %p46
      %s48 = ssub.s32 %s19, %s26
      %p49 = scmp.eq.s32.totalorder %s48, 0
      %s51 = sadd.s32 %s50, 1
      %s52 = scalar_select %p49, %s50, %s51
      %p55 = pneg %p49
      %p56 = scmp.eq.s32.totalorder %s19, 1
      %p57 = por %p55, %p56
      %p58 = scmp.ne.s32.totalorder %s50, %s53
      %p59 = scmp.eq.s32.totalorder %s19, 0
      %p60 = por %p58, %p59
      %p61 = scmp.ne.s32.totalorder %s50, %s53
      %p62 = scmp.eq.s32.totalorder %s24, 1
      %p63 = por %p61, %p62
      %p64 = scmp.ne.s32.totalorder %s53, %s54
      %p65 = scmp.eq.s32.totalorder %s24, 0
      %p66 = por %p64, %p65
      %p67 = scmp.ne.s32.totalorder %s53, %s54
      %p68 = scmp.eq.s32.totalorder %s25, 1
      %p69 = por %p67, %p68
      %p71 = scmp.ne.s32.totalorder %s54, %s70
      %p72 = scmp.eq.s32.totalorder %s25, 0
      %p73 = por %p71, %p72
      %s74 = ssub.s32 %s19, %s26
      %p75 = scmp.eq.s32.totalorder %s74, 0
      %s77 = sadd.s32 %s76, 1
      %s78 = scalar_select %p75, %s76, %s77
      %p81 = pneg %p75
      %p82 = scmp.eq.s32.totalorder %s19, 1
      %p83 = por %p81, %p82
      %p84 = scmp.ne.s32.totalorder %s76, %s79
      %p85 = scmp.eq.s32.totalorder %s19, 0
      %p86 = por %p84, %p85
      %p87 = scmp.ne.s32.totalorder %s76, %s79
      %p88 = scmp.eq.s32.totalorder %s24, 1
      %p89 = por %p87, %p88
      %p90 = scmp.ne.s32.totalorder %s79, %s80
      %p91 = scmp.eq.s32.totalorder %s24, 0
      %p92 = por %p90, %p91
      %p93 = scmp.ne.s32.totalorder %s79, %s80
      %p94 = scmp.eq.s32.totalorder %s25, 1
      %p95 = por %p93, %p94
      %p97 = scmp.ne.s32.totalorder %s80, %s96
      %p98 = scmp.eq.s32.totalorder %s25, 0
      %p99 = por %p97, %p98
      %s100 = ssub.s32 %s19, %s26
      %p101 = scmp.eq.s32.totalorder %s100, 0
      %s103 = sadd.s32 %s102, 1
      %s104 = scalar_select %p101, %s102, %s103
      %p107 = pneg %p101
      %p108 = scmp.eq.s32.totalorder %s19, 1
      %p109 = por %p107, %p108
      %p110 = scmp.ne.s32.totalorder %s102, %s105
      %p111 = scmp.eq.s32.totalorder %s19, 0
      %p112 = por %p110, %p111
      %p113 = scmp.ne.s32.totalorder %s102, %s105
      %p114 = scmp.eq.s32.totalorder %s24, 1
      %p115 = por %p113, %p114
      %p116 = scmp.ne.s32.totalorder %s105, %s106
      %p117 = scmp.eq.s32.totalorder %s24, 0
      %p118 = por %p116, %p117
      %p119 = scmp.ne.s32.totalorder %s105, %s106
      %p120 = scmp.eq.s32.totalorder %s25, 1
      %p121 = por %p119, %p120
      %p123 = scmp.ne.s32.totalorder %s106, %s122
      %p124 = scmp.eq.s32.totalorder %s25, 0
      %p125 = por %p123, %p124
      %s126 = ssub.s32 %s19, %s26
      %p127 = scmp.eq.s32.totalorder %s126, 0
      %s129 = sadd.s32 %s128, 1
      %s130 = scalar_select %p127, %s128, %s129
      %p133 = pneg %p127
      %p134 = scmp.eq.s32.totalorder %s19, 1
      %p135 = por %p133, %p134
      %p136 = scmp.ne.s32.totalorder %s128, %s131
      %p137 = scmp.eq.s32.totalorder %s19, 0
      %p138 = por %p136, %p137
      %p139 = scmp.ne.s32.totalorder %s128, %s131
      %p140 = scmp.eq.s32.totalorder %s24, 1
      %p141 = por %p139, %p140
      %p142 = scmp.ne.s32.totalorder %s131, %s132
      %p143 = scmp.eq.s32.totalorder %s24, 0
      %p144 = por %p142, %p143
      %p145 = scmp.ne.s32.totalorder %s131, %s132
      %p146 = scmp.eq.s32.totalorder %s25, 1
      %p147 = por %p145, %p146
      %p149 = scmp.ne.s32.totalorder %s132, %s148
      %p150 = scmp.eq.s32.totalorder %s25, 0
      %p151 = por %p149, %p150
      %s153 = sadd.s32 %s152, 1
      %p156 = scmp.eq.s32.totalorder %s19, 1
      %p157 = scmp.ne.s32.totalorder %s152, %s154
      %p158 = scmp.eq.s32.totalorder %s19, 0
      %p159 = por %p157, %p158
      %p160 = scmp.ne.s32.totalorder %s152, %s154
      %p161 = scmp.eq.s32.totalorder %s24, 1
      %p162 = por %p160, %p161
      %p163 = scmp.ne.s32.totalorder %s154, %s155
      %p164 = scmp.eq.s32.totalorder %s24, 0
      %p165 = por %p163, %p164
      %p166 = scmp.ne.s32.totalorder %s154, %s155
      %p167 = scmp.eq.s32.totalorder %s25, 1
      %p168 = por %p166, %p167
      %p170 = scmp.ne.s32.totalorder %s155, %s169
      %p171 = scmp.eq.s32.totalorder %s25, 0
      %p172 = por %p170, %p171
      %p173 = scmp.le.s32.totalorder 1, %s19
      %p174 = scmp.lt.s32.totalorder %s19, 3
      %p175 = pnand %p173, %p174
      %p176 = pneg %p175
      // Predicated region
      $region9: #{tpu_custom_call.1} parent=5 // pred_check
        _
      $region10: #{tpu_custom_call.1} parent=5 // pred_check_branch
        %178 = sbr.rel (%p175) target = $region12
      $region11: #{tpu_custom_call.1} parent=5 // pred_region
        %s179 = ssub.s32 %s19, 1
        // Predicated region
        $region13: #{tpu_custom_call.1} parent=11 // pred_check
          %p180 = pneg %p40
        $region14: #{tpu_custom_call.1} parent=11 // pred_check_branch
          %182 = sbr.rel (%p180) target = $region16
        $region15: #{tpu_custom_call.1} parent=11 // pred_region
          %184 = vsyncadd [#allocation4], 0
          %s185 = sshll.u32 %s0, 4
          %s186 = int_to_ptr.hbm [resolvable:$true] %s185
          %s187 = sshll.u32 [#allocation3], 4
          %s188 = int_to_ptr.vmem [resolvable:$true] %s187
          %193 = dma.hbm_to_vmem [thread:$0]  %s186, 256, %s188, [#allocation4], 128, 128, 8
        $region16: #{tpu_custom_call.1} parent=11 // pred_fallthru
          _
      $region12: #{tpu_custom_call.1} parent=5 // pred_fallthru
        _
      %p194 = scmp.lt.s32.totalorder %s19, 2
      // Predicated region
      $region17: #{tpu_custom_call.1} parent=5 // pred_check
        %p195 = pneg %p194
      $region18: #{tpu_custom_call.1} parent=5 // pred_check_branch
        %197 = sbr.rel (%p195) target = $region20
      $region19: #{tpu_custom_call.1} parent=5 // pred_region
        // Predicated region
        $region21: #{tpu_custom_call.1} parent=19 // pred_check
          %p198 = pneg %p60
        $region22: #{tpu_custom_call.1} parent=19 // pred_check_branch
          %200 = sbr.rel (%p198) target = $region24
        $region23: #{tpu_custom_call.1} parent=19 // pred_region
          %s201 = sand.u32 %s19, 1
          %s202 = scalar_lea.sflag [#allocation7], %s201
          %s203 = sand.u32 %s50, 1
          %s204 = smul.addr %s203, 128
          %s205 = scalar_lea.vmem [#allocation6], %s204
          %207 = vsyncadd %s202, 0
          %s208 = smul.addr %s19, 16
          %s209 = smul.addr %s208, 8
          %s210 = scalar_lea.hbm %s1, %s209
          %s211 = sshll.u32 %s210, 4
          %s212 = int_to_ptr.hbm [resolvable:$true] %s211
          %s213 = sshll.u32 %s205, 4
          %s214 = int_to_ptr.vmem [resolvable:$true] %s213
          %219 = dma.hbm_to_vmem [thread:$0]  %s212, 2048, %s214, %s202, 128, 128, 8
        $region24: #{tpu_custom_call.1} parent=19 // pred_fallthru
          _
        // Predicated region
        $region25: #{tpu_custom_call.1} parent=19 // pred_check
          %p220 = pneg %p86
        $region26: #{tpu_custom_call.1} parent=19 // pred_check_branch
          %222 = sbr.rel (%p220) target = $region28
        $region27: #{tpu_custom_call.1} parent=19 // pred_region
          %s223 = sand.u32 %s19, 1
          %s224 = scalar_lea.sflag [#allocation7], %s223
          %s225 = sand.u32 %s76, 1
          %s226 = scalar_lea.vmem [#allocation8], %s225
          %228 = vsyncadd %s224, 0
          %s229 = scalar_lea.hbm %s2, %s19
          %s231 = sshll.u32 %s229, 4
          %s232 = int_to_ptr.hbm [resolvable:$true] %s231
          %s233 = sshll.u32 %s226, 4
          %s234 = int_to_ptr.vmem [resolvable:$true] %s233
          %236 = dma.hbm_to_vmem [thread:$0]  %s232, 16, %s234, %s224
        $region28: #{tpu_custom_call.1} parent=19 // pred_fallthru
          _
        // Predicated region
        $region29: #{tpu_custom_call.1} parent=19 // pred_check
          %p237 = pneg %p112
        $region30: #{tpu_custom_call.1} parent=19 // pred_check_branch
          %239 = sbr.rel (%p237) target = $region32
        $region31: #{tpu_custom_call.1} parent=19 // pred_region
          %p240 = scmp.lt.s32.totalorder %s19, 1
          %s241 = scalar_select %p240, %s19, 1
          %s242 = scalar_lea.vmem %s3, %s241
        $region32: #{tpu_custom_call.1} parent=19 // pred_fallthru
          _
        // Predicated region
        $region33: #{tpu_custom_call.1} parent=19 // pred_check
          %p243 = pneg %p138
        $region34: #{tpu_custom_call.1} parent=19 // pred_check_branch
          %245 = sbr.rel (%p243) target = $region36
        $region35: #{tpu_custom_call.1} parent=19 // pred_region
          %s246 = sand.u32 %s128, 1
          %s247 = scalar_lea.sflag [#allocation10], %s246
          %s248 = sand.u32 %s128, 1
          %s249 = scalar_lea.vmem [#allocation9], %s248
          %251 = vsyncadd %s247, 0
          %s252 = scalar_lea.hbm %s4, %s19
          %s254 = sshll.u32 %s252, 4
          %s255 = int_to_ptr.hbm [resolvable:$true] %s254
          %s256 = sshll.u32 %s249, 4
          %s257 = int_to_ptr.vmem [resolvable:$true] %s256
          %259 = dma.hbm_to_vmem [thread:$0]  %s255, 16, %s257, %s247
        $region36: #{tpu_custom_call.1} parent=19 // pred_fallthru
          _
      $region20: #{tpu_custom_call.1} parent=5 // pred_fallthru
        _
      %p260 = scmp.le.s32.totalorder 1, %s19
      %p261 = scmp.lt.s32.totalorder %s19, 3
      %p262 = pnand %p260, %p261
      %p263 = pneg %p262
      // Predicated region
      $region37: #{tpu_custom_call.1} parent=5 // pred_check
        _
      $region38: #{tpu_custom_call.1} parent=5 // pred_check_branch
        %265 = sbr.rel (%p262) target = $region40
      $region39: #{tpu_custom_call.1} parent=5 // pred_region
        %s266 = ssub.s32 %s19, 1
        // Predicated region
        $region41: #{tpu_custom_call.1} parent=39 // pred_check
          %p267 = pneg %p40
        $region42: #{tpu_custom_call.1} parent=39 // pred_check_branch
          %269 = sbr.rel (%p267) target = $region44
        $region43: #{tpu_custom_call.1} parent=39 // pred_region
          %271 = dma.done [#allocation4], 256
        $region44: #{tpu_custom_call.1} parent=39 // pred_fallthru
          _
        %s272 = sand.u32 %s24, 1
        %s273 = scalar_lea.sflag [#allocation7], %s272
        %s274 = sand.u32 %s53, 1
        %s275 = smul.addr %s274, 128
        %s276 = scalar_lea.vmem [#allocation6], %s275
        // Predicated region
        $region45: #{tpu_custom_call.1} parent=39 // pred_check
          %p277 = pneg %p66
        $region46: #{tpu_custom_call.1} parent=39 // pred_check_branch
          %279 = sbr.rel (%p277) target = $region48
        $region47: #{tpu_custom_call.1} parent=39 // pred_region
          %281 = dma.done %s273, 2048
        $region48: #{tpu_custom_call.1} parent=39 // pred_fallthru
          _
        %s282 = sand.u32 %s24, 1
        %s283 = scalar_lea.sflag [#allocation7], %s282
        %s284 = sand.u32 %s79, 1
        %s285 = scalar_lea.vmem [#allocation8], %s284
        // Predicated region
        $region49: #{tpu_custom_call.1} parent=39 // pred_check
          %p286 = pneg %p92
        $region50: #{tpu_custom_call.1} parent=39 // pred_check_branch
          %288 = sbr.rel (%p286) target = $region52
        $region51: #{tpu_custom_call.1} parent=39 // pred_region
          %290 = dma.done %s283, 16
        $region52: #{tpu_custom_call.1} parent=39 // pred_fallthru
          _
        %s291 = sand.u32 %s131, 1
        %s292 = scalar_lea.sflag [#allocation10], %s291
        %s293 = sand.u32 %s131, 1
        %s294 = scalar_lea.vmem [#allocation9], %s293
        // Predicated region
        $region53: #{tpu_custom_call.1} parent=39 // pred_check
          %p295 = pneg %p144
        $region54: #{tpu_custom_call.1} parent=39 // pred_check_branch
          %297 = sbr.rel (%p295) target = $region56
        $region55: #{tpu_custom_call.1} parent=39 // pred_region
          %299 = dma.done %s292, 16
        $region56: #{tpu_custom_call.1} parent=39 // pred_fallthru
          _
        %p300 = pneg %p40
        %p301 = pneg %p37
        %s302 = sand.u32 %s24, 1
        %s303 = scalar_lea.sflag [#allocation7], %s302
        %s304 = sand.u32 %s53, 1
        %s305 = smul.addr %s304, 128
        %s306 = scalar_lea.vmem [#allocation6], %s305
        %p307 = pneg %p66
        %p308 = pneg %p63
        %s309 = sand.u32 %s24, 1
        %s310 = scalar_lea.sflag [#allocation7], %s309
        %s311 = sand.u32 %s79, 1
        %s312 = scalar_lea.vmem [#allocation8], %s311
        %p313 = pneg %p92
        %p314 = pneg %p89
        %p315 = scmp.lt.s32.totalorder %s24, 1
        %s316 = scalar_select %p315, %s24, 1
        %s317 = scalar_lea.vmem %s3, %s316
        %p318 = pneg %p118
        %p319 = pneg %p115
        %s320 = sand.u32 %s131, 1
        %s321 = scalar_lea.sflag [#allocation10], %s320
        %s322 = sand.u32 %s131, 1
        %s323 = scalar_lea.vmem [#allocation9], %s322
        %p324 = pneg %p144
        %p325 = pneg %p141
        %p326 = pneg %p165
        %p327 = pneg %p162
        %p328 = scmp.lt.s32.totalorder %s24, 1
        %s329 = scalar_select %p328, %s24, 1
        %s330 = scalar_lea.vmem %s3, %s329
        %p331 = scmp.eq.s32.totalorder %s24, 0
        // Predicated region
        $region57: #{tpu_custom_call.1} parent=39 // pred_check
          %p332 = pneg %p331
        $region58: #{tpu_custom_call.1} parent=39 // pred_check_branch
          %334 = sbr.rel (%p332) target = $region60
        $region59: #{tpu_custom_call.1} parent=39 // pred_region
          %v335 = vld [vmem:[#allocation3] sm:$0xff]
          %v336 = vld [vmem:[#allocation3 + $0x8] sm:$0xff]
          %337 = vst [vmem:[#allocation2] sm:$0xff] %v335
          %338 = vst [vmem:[#allocation2 + $0x8] sm:$0xff] %v336
        $region60: #{tpu_custom_call.1} parent=39 // pred_fallthru
          _
        %v339 = vld [vmem:[#allocation2] sm:$0xff]
        %v340 = vld [vmem:[#allocation2 + $0x8] sm:$0xff]
        %v341 = vld [vmem:[%s276] sm:$0xff]
        %v342 = vld [vmem:[%s276 + $0x8] sm:$0xff]
        %v343 = vld [vmem:[%s276 + $0x10] sm:$0xff]
        %v344 = vld [vmem:[%s276 + $0x18] sm:$0xff]
        %v345 = vld [vmem:[%s276 + $0x20] sm:$0xff]
        %v346 = vld [vmem:[%s276 + $0x28] sm:$0xff]
        %v347 = vld [vmem:[%s276 + $0x30] sm:$0xff]
        %v348 = vld [vmem:[%s276 + $0x38] sm:$0xff]
        %v349 = vld [vmem:[%s276 + $0x40] sm:$0xff]
        %v350 = vld [vmem:[%s276 + $0x48] sm:$0xff]
        %v351 = vld [vmem:[%s276 + $0x50] sm:$0xff]
        %v352 = vld [vmem:[%s276 + $0x58] sm:$0xff]
        %v353 = vld [vmem:[%s276 + $0x60] sm:$0xff]
        %v354 = vld [vmem:[%s276 + $0x68] sm:$0xff]
        %v355 = vld [vmem:[%s276 + $0x70] sm:$0xff]
        %v356 = vld [vmem:[%s276 + $0x78] sm:$0xff]
        %v357 = vld [vmem:[%s285] sm:$0x1]
        %v359 = vperm.slane %v357, 0
        %361 = vmatpush.msra.mxu0 %v356
        %362 = vmatpush.msra.mxu0 %v355
        %363 = vmatpush.msra.mxu0 %v354
        %364 = vmatpush.msra.mxu0 %v353
        %365 = vmatpush.msra.mxu0 %v352
        %366 = vmatpush.msra.mxu0 %v351
        %367 = vmatpush.msra.mxu0 %v350
        %368 = vmatpush.msra.mxu0 %v349
        %369 = vmatpush.msra.mxu0 %v348
        %370 = vmatpush.msra.mxu0 %v347
        %371 = vmatpush.msra.mxu0 %v346
        %372 = vmatpush.msra.mxu0 %v345
        %373 = vmatpush.msra.mxu0 %v344
        %374 = vmatpush.msra.mxu0 %v343
        %375 = vmatpush.msra.mxu0 %v342
        %376 = vmatpush.msra.mxu0 %v341
        %377 = vmatmul.f32.gmra.mxu0 %v339
        %v378 = vpop.f32.mrf.mxu0
        %v379 = vadd.f32 %v359, %v378
        %380 = vmatmul.f32.gmra.mxu0 %v340
        %v381 = vpop.f32.mrf.mxu0
        %v382 = vadd.f32 %v359, %v381
        %383 = vdwg.mxu0
        %v384 = vadd.f32 %v379, %v382
        %v385 = vrot.slane %v384, 4
        %v386 = vadd.f32 %v384, %v385
        %v387 = vrot.slane %v386, 2
        %v388 = vadd.f32 %v386, %v387
        %v389 = vrot.slane %v388, 1
        %v390 = vadd.f32 %v388, %v389
        %v391 = vmul.f32 %v390, 0.0625
        %v392 = vmul.f32 %v379, %v379
        %v393 = vmul.f32 %v382, %v382
        %v394 = vadd.f32 %v392, %v393
        %v395 = vrot.slane %v394, 4
        %v396 = vadd.f32 %v394, %v395
        %v397 = vrot.slane %v396, 2
        %v398 = vadd.f32 %v396, %v397
        %v399 = vrot.slane %v398, 1
        %v400 = vadd.f32 %v398, %v399
        %v401 = vmul.f32 %v400, 0.0625
        %v402 = vmul.f32 %v391, %v391
        %v403 = vsub.f32 %v401, %v402
        %v404 = vmax.f32 %v403, 0.0
        %v405 = vld [vmem:[%s330] sm:$0x1]
        %v406 = vld [vmem:[%s294] sm:$0x1]
        %v407 = vadd.f32 %v404, 1e-05
        %v408 = vrsqrt.pop %v407
        %v409 = vmul.f32 %v408, %v407
        %v410 = vmul.f32 %v409, %v408
        %v411 = vmul.f32 0.5, %v410
        %v412 = vsub.f32 1.5, %v411
        %v413 = vmul.f32 %v408, %v412
        %vm414 = vweird.f32 %v407
        %vm415 = vweird.f32 %v408
        %vm416 = vmor %vm414, %vm415
        %v417 = vsel %vm416, %v408, %v413
        %v418 = vmul.f32 %v405, %v417
        %v419 = vmul.f32 %v391, %v418
        %v420 = vsub.f32 %v406, %v419
        %v422 = vperm.slane %v418, 0
        %v424 = vmul.f32 %v379, %v422
        %v425 = vmul.f32 %v382, %v422
        %v427 = vperm.slane %v420, 0
        %v429 = vadd.f32 %v424, %v427
        %v430 = vadd.f32 %v425, %v427
        %v431 = vmax.f32 %v429, 0.0
        %v432 = vmax.f32 %v430, 0.0
        %v433 = vmul.f32 %v431, %v431
        %v434 = vmul.f32 %v432, %v432
        %435 = vadd.xlane.f32.xlu0 %v433
        %v436 = vpop.xlane.xlu0 %435
        %437 = vadd.xlane.f32.xlu0 %v434
        %v438 = vpop.xlane.xlu0 %437
        %v439 = vmax.f32 %v436, 1e-24
        %v440 = vmax.f32 %v438, 1e-24
        %v441 = vrsqrt.pop %v439
        %v442 = vmul.f32 %v441, %v439
        %v443 = vmul.f32 %v442, %v441
        %v444 = vmul.f32 0.5, %v443
        %v445 = vsub.f32 1.5, %v444
        %v446 = vmul.f32 %v441, %v445
        %vm447 = vweird.f32 %v439
        %vm448 = vweird.f32 %v441
        %vm449 = vmor %vm447, %vm448
        %v450 = vsel %vm449, %v441, %v446
        %v451 = vrsqrt.pop %v440
        %v452 = vmul.f32 %v451, %v440
        %v453 = vmul.f32 %v452, %v451
        %v454 = vmul.f32 0.5, %v453
        %v455 = vsub.f32 1.5, %v454
        %v456 = vmul.f32 %v451, %v455
        %vm457 = vweird.f32 %v440
        %vm458 = vweird.f32 %v451
        %vm459 = vmor %vm457, %vm458
        %v460 = vsel %vm459, %v451, %v456
        %v461 = vmul.f32 %v431, %v450
        %v462 = vmul.f32 %v432, %v460
        %463 = vst [vmem:[#allocation2] sm:$0xff] %v461
        %464 = vst [vmem:[#allocation2 + $0x8] sm:$0xff] %v462
        %465 = vst [vmem:[#allocation11] sm:$0xff] %v461
        %466 = vst [vmem:[#allocation11 + $0x8] sm:$0xff] %v462
        // Predicated region
        $region61: #{tpu_custom_call.1} parent=39 // pred_check
          %p467 = pneg %p162
        $region62: #{tpu_custom_call.1} parent=39 // pred_check_branch
          %469 = sbr.rel (%p467) target = $region64
        $region63: #{tpu_custom_call.1} parent=39 // pred_region
          %471 = vsyncadd [#allocation5], 0
          %s472 = sshll.u32 [#allocation11], 4
          %s473 = int_to_ptr.vmem [resolvable:$true] %s472
          %s474 = sshll.u32 %s5, 4
          %s475 = int_to_ptr.hbm [resolvable:$true] %s474
          %480 = dma.vmem_to_hbm [thread:$0]  %s473, 256, %s475, [#allocation5], 128, 128, 8
        $region64: #{tpu_custom_call.1} parent=39 // pred_fallthru
          _
        // Predicated region
        $region65: #{tpu_custom_call.1} parent=39 // pred_check
          %p481 = pneg %p162
        $region66: #{tpu_custom_call.1} parent=39 // pred_check_branch
          %483 = sbr.rel (%p481) target = $region68
        $region67: #{tpu_custom_call.1} parent=39 // pred_region
          %485 = dma.done [#allocation5], 256
        $region68: #{tpu_custom_call.1} parent=39 // pred_fallthru
          _
      $region40: #{tpu_custom_call.1} parent=5 // pred_fallthru
        _
      %p486 = scmp.le.s32.totalorder 2, %s19
      // Predicated region
      $region69: #{tpu_custom_call.1} parent=5 // pred_check
        %p487 = pneg %p486
      $region70: #{tpu_custom_call.1} parent=5 // pred_check_branch
        %489 = sbr.rel (%p487) target = $region72
      $region71: #{tpu_custom_call.1} parent=5 // pred_region
        %s490 = ssub.s32 %s19, 2
      $region72: #{tpu_custom_call.1} parent=5 // pred_fallthru
        _
    $region6: #{tpu_custom_call.1} parent=1 // loop_footer
      %s23 = sadd.s32 1, %s19
    $region7: #{tpu_custom_call.1} parent=1 // loop_footer_branch
      %18 = sbr.rel target = $region3
    $region8: #{tpu_custom_call.1} parent=1 // loop_exit
      _
    %491 = vsyncpa [#allocation4], 1
    %s492 = scalar_lea.sflag [#allocation4], 1
    %493 = vsyncpa %s492, 1
    %494 = vsyncpa [#allocation7], 1
    %s495 = scalar_lea.sflag [#allocation7], 1
    %496 = vsyncpa %s495, 1
    %497 = vsyncpa [#allocation10], 1
    %s498 = scalar_lea.sflag [#allocation10], 1
    %499 = vsyncpa %s498, 1
    %500 = vsyncpa [#allocation5], 1
    %s501 = scalar_lea.sflag [#allocation5], 1
    %502 = vsyncpa %s501, 1

</llo_original>
